<compile_context>
chip_gen: v7x
topology: tpu7x:2x2x1
jax: 0.10.0
libtpu: 0.0.40
codegen_flags: <defaults>
</compile_context>

<pallas_src>
import functools

import jax
import jax.numpy as jnp
from jax.experimental import pallas as pl
from jax.experimental.pallas import tpu as pltpu


# ---------------------------------------------------------------------------
# Kernel: one batch tile of  linear1 -> relu -> linear2 -> L2-normalize.
# ---------------------------------------------------------------------------
def _mlp_l2norm_kernel(x_ref, w1_ref, b1_ref, w2_ref, b2_ref, o_ref,
                       *, use_bf16):
    x = x_ref[...]
    w1 = w1_ref[...]
    if use_bf16:
        x = x.astype(jnp.bfloat16)
        w1 = w1.astype(jnp.bfloat16)

    # linear1: (tb, Dp) @ (Dp, Hp) + (1, Hp), ReLU.  f32 accumulation on MXU.
    h = jnp.dot(x, w1, preferred_element_type=jnp.float32)
    h = jnp.maximum(h + b1_ref[...], 0.0)

    h_in = h
    w2 = w2_ref[...]
    if use_bf16:
        h_in = h.astype(jnp.bfloat16)
        w2 = w2.astype(jnp.bfloat16)

    # linear2: (tb, Hp) @ (Hp, Dp) + (1, Dp).
    y = jnp.dot(h_in, w2, preferred_element_type=jnp.float32) + b2_ref[...]

    # F.normalize(y, p=2, dim=1) == y / clamp_min(||y||, 1e-12)
    #                            == y * rsqrt(clamp_min(sum(y*y), 1e-24))
    # (padded lanes of y are exactly zero, so the sum is unchanged by padding)
    inv_norm = jax.lax.rsqrt(
        jnp.maximum(jnp.sum(y * y, axis=1, keepdims=True), 1e-24))
    o_ref[...] = (y * inv_norm).astype(o_ref.dtype)


# ---------------------------------------------------------------------------
# Tiling helpers.
# ---------------------------------------------------------------------------
_VMEM_LIMIT_BYTES = 48 << 20     # explicit scoped-VMEM limit (fits v7x's 64 MiB)
_TILE_VMEM_BUDGET = 40 << 20     # what we actually plan tiles against


def _round_up(x, m):
    return ((x + m - 1) // m) * m


def _pick_batch_tile(B, Dp, Hp, itemsize=4):
    """Largest batch tile (multiple of 8 sublanes, <=512) that fits the budget."""
    # Resident operands (w1, b1, w2, b2): default pipeline double-buffers them.
    resident = 2 * (Dp * Hp + Hp * Dp + Hp + Dp) * itemsize
    # Per batch row: x block + o block (double-buffered) + h intermediate + y.
    per_row = (2 * Dp + 2 * Dp + Hp + Dp) * itemsize
    avail = _TILE_VMEM_BUDGET - resident
    max_rows = max(avail // per_row, 8) if avail > 0 else 8
    tb = min(512, int(max_rows), _round_up(B, 8))
    tb = max((tb // 8) * 8, 8)
    return tb


# ---------------------------------------------------------------------------
# Forward wrapper.
# ---------------------------------------------------------------------------
def _contrastive_cluster_forward(x, w1, b1, w2, b2, centroids,
                                 use_bf16_matmul=False):
    """linear1 -> relu -> linear2 -> l2norm in Pallas; centroid l2norm in jnp."""
    B, D = x.shape
    H = w1.shape[1]
    K = centroids.shape[0]
    assert w1.shape == (D, H) and w2.shape == (H, D)
    assert b1.shape == (1, H) and b2.shape == (1, D)
    assert centroids.shape == (K, D)

    # Lane-dense padding (exact: zero pads contribute nothing anywhere).
    Dp = _round_up(D, 128)
    Hp = _round_up(H, 128)

    tb = _pick_batch_tile(B, Dp, Hp)
    Bp = _round_up(B, tb)
    grid = (pl.cdiv(Bp, tb),)

    x_p = jnp.pad(x, ((0, Bp - B), (0, Dp - D)))
    w1_p = jnp.pad(w1, ((0, Dp - D), (0, Hp - H)))
    b1_p = jnp.pad(b1, ((0, 0), (0, Hp - H)))
    w2_p = jnp.pad(w2, ((0, Hp - H), (0, Dp - D)))
    b2_p = jnp.pad(b2, ((0, 0), (0, Dp - D)))

    cost = pl.CostEstimate(
        flops=2 * Bp * (Dp * Hp + Hp * Dp),
        transcendentals=Bp,
        bytes_accessed=4 * (2 * Bp * Dp + Dp * Hp + Hp * Dp + Hp + Dp),
    )

    y_p = pl.pallas_call(
        functools.partial(_mlp_l2norm_kernel, use_bf16=use_bf16_matmul),
        grid=grid,
        out_shape=jax.ShapeDtypeStruct((Bp, Dp), jnp.float32),
        in_specs=[
            pl.BlockSpec((tb, Dp), lambda i: (i, 0)),   # x: tiled over batch
            pl.BlockSpec((Dp, Hp), lambda i: (0, 0)),   # w1: resident
            pl.BlockSpec((1, Hp), lambda i: (0, 0)),    # b1: resident
            pl.BlockSpec((Hp, Dp), lambda i: (0, 0)),   # w2: resident
            pl.BlockSpec((1, Dp), lambda i: (0, 0)),    # b2: resident
        ],
        out_specs=pl.BlockSpec((tb, Dp), lambda i: (i, 0)),
        compiler_params=pltpu.CompilerParams(
            dimension_semantics=("parallel",),
            vmem_limit_bytes=_VMEM_LIMIT_BYTES,
        ),
        cost_estimate=cost,
    )(x_p, w1_p, b1_p, w2_p, b2_p)

    y = y_p[:B, :D]

    # Centroid normalization: K*D is tiny; keep it as plain jnp in the same jit.
    c_inv = jax.lax.rsqrt(
        jnp.maximum(jnp.sum(centroids * centroids, axis=1, keepdims=True),
                    1e-24))
    c = centroids * c_inv

    return y, c


# Jitted entry point (removes per-call trace/dispatch overhead).
contrastive_cluster_forward = jax.jit(
    _contrastive_cluster_forward, static_argnames=("use_bf16_matmul",))


# ---------------------------------------------------------------------------
# Pure-JAX reference (matches the torch module's forward).
# ---------------------------------------------------------------------------
def _reference_forward(x, w1, b1, w2, b2, centroids):
    h = jnp.maximum(x @ w1 + b1, 0.0)
    y = h @ w2 + b2
    y = y / jnp.maximum(jnp.linalg.norm(y, axis=1, keepdims=True), 1e-12)
    c = centroids / jnp.maximum(
        jnp.linalg.norm(centroids, axis=1, keepdims=True), 1e-12)
    return y, c


if __name__ == "__main__":
    # Small shapes consistent with the module:
    #   batch=8, input_dim=32, hidden_dim=128 (module default), n_clusters=3
    B, D, H, K = 8, 32, 128, 3

    key = jax.random.PRNGKey(0)
    kx, kc, kw1, kb1, kw2, kb2 = jax.random.split(key, 6)

    x = jax.random.normal(kx, (B, D), dtype=jnp.float32)

    # Deterministic, synthetic parameter initialization (shapes from __init__).
    centroids = jax.random.normal(kc, (K, D), dtype=jnp.float32)     # torch.randn
    w1 = jax.random.uniform(kw1, (D, H), jnp.float32, -1.0, 1.0) / jnp.sqrt(D)
    b1 = jax.random.uniform(kb1, (1, H), jnp.float32, -1.0, 1.0) / jnp.sqrt(D)
    w2 = jax.random.uniform(kw2, (H, D), jnp.float32, -1.0, 1.0) / jnp.sqrt(H)
    b2 = jax.random.uniform(kb2, (1, D), jnp.float32, -1.0, 1.0) / jnp.sqrt(H)

    y, c = contrastive_cluster_forward(x, w1, b1, w2, b2, centroids)
    jax.block_until_ready((y, c))

    # Sanity check against the pure-JAX reference (f32 path).
    y_ref, c_ref = _reference_forward(x, w1, b1, w2, b2, centroids)
    assert y.shape == (B, D) and c.shape == (K, D)
    assert jnp.allclose(y, y_ref, atol=1e-5, rtol=1e-5)
    assert jnp.allclose(c, c_ref, atol=1e-5, rtol=1e-5)

    print("KERNEL_OK")
</pallas_src>

<mosaic_0001>
module attributes {stable_mosaic.version = 11 : i64} {
  func.func @_mlp_l2norm_kernel(%arg0: i32, %arg1: memref<8x128xf32, #tpu.memory_space<vmem>>, %arg2: memref<128x128xf32, #tpu.memory_space<vmem>>, %arg3: memref<1x128xf32, #tpu.memory_space<vmem>>, %arg4: memref<128x128xf32, #tpu.memory_space<vmem>>, %arg5: memref<1x128xf32, #tpu.memory_space<vmem>>, %arg6: memref<8x128xf32, #tpu.memory_space<vmem>>) attributes {dimension_semantics = [#tpu.dimension_semantics<parallel>], iteration_bounds = array<i64: 1>, scalar_prefetch = 0 : i64, scratch_operands = 0 : i64, tpu.core_type = #tpu.core_type<tc>, window_params = [{transform_indices = @transform_0, window_bounds = array<i64: 8, 128>}, {pipeline_mode = #tpu.pipeline_mode<synchronous>, transform_indices = @transform_1, window_bounds = array<i64: 128, 128>}, {pipeline_mode = #tpu.pipeline_mode<synchronous>, transform_indices = @transform_2, window_bounds = array<i64: 1, 128>}, {pipeline_mode = #tpu.pipeline_mode<synchronous>, transform_indices = @transform_3, window_bounds = array<i64: 128, 128>}, {pipeline_mode = #tpu.pipeline_mode<synchronous>, transform_indices = @transform_4, window_bounds = array<i64: 1, 128>}, {transform_indices = @transform_5, window_bounds = array<i64: 8, 128>}]} {
    %c0 = arith.constant 0 : index
    %c0_0 = arith.constant 0 : index
    %0 = vector.load %arg1[%c0, %c0_0] : memref<8x128xf32, #tpu.memory_space<vmem>>, vector<8x128xf32>
    %c0_1 = arith.constant 0 : index
    %c0_2 = arith.constant 0 : index
    %1 = vector.load %arg2[%c0_1, %c0_2] : memref<128x128xf32, #tpu.memory_space<vmem>>, vector<128x128xf32>
    %cst = arith.constant dense<0.000000e+00> : vector<8x128xf32>
    %2 = tpu.matmul %0, %1, %cst {dimension_numbers = #tpu.dot_dimension_numbers<[1], [0], [0], [1], [0, 0, 1, 1], [], []>} : vector<8x128xf32>, vector<128x128xf32>, vector<8x128xf32> -> vector<8x128xf32>
    %c0_3 = arith.constant 0 : index
    %c0_4 = arith.constant 0 : index
    %3 = vector.load %arg3[%c0_3, %c0_4] : memref<1x128xf32, #tpu.memory_space<vmem>>, vector<1x128xf32>
    %4 = vector.broadcast %3 : vector<1x128xf32> to vector<8x128xf32>
    %5 = arith.addf %2, %4 : vector<8x128xf32>
    %cst_5 = arith.constant 0.000000e+00 : f32
    %6 = vector.broadcast %cst_5 : f32 to vector<8x128xf32>
    %7 = arith.maximumf %5, %6 : vector<8x128xf32>
    %c0_6 = arith.constant 0 : index
    %c0_7 = arith.constant 0 : index
    %8 = vector.load %arg4[%c0_6, %c0_7] : memref<128x128xf32, #tpu.memory_space<vmem>>, vector<128x128xf32>
    %cst_8 = arith.constant dense<0.000000e+00> : vector<8x128xf32>
    %9 = tpu.matmul %7, %8, %cst_8 {dimension_numbers = #tpu.dot_dimension_numbers<[1], [0], [0], [1], [0, 0, 1, 1], [], []>} : vector<8x128xf32>, vector<128x128xf32>, vector<8x128xf32> -> vector<8x128xf32>
    %c0_9 = arith.constant 0 : index
    %c0_10 = arith.constant 0 : index
    %10 = vector.load %arg5[%c0_9, %c0_10] : memref<1x128xf32, #tpu.memory_space<vmem>>, vector<1x128xf32>
    %11 = vector.broadcast %10 : vector<1x128xf32> to vector<8x128xf32>
    %12 = arith.addf %9, %11 : vector<8x128xf32>
    %13 = arith.mulf %12, %12 : vector<8x128xf32>
    %cst_11 = arith.constant dense<0.000000e+00> : vector<8xf32>
    %14 = vector.multi_reduction <add>, %13, %cst_11 [1] : vector<8x128xf32> to vector<8xf32>
    %15 = vector.shape_cast %14 : vector<8xf32> to vector<8x1xf32>
    %cst_12 = arith.constant 1.000000e-24 : f32
    %16 = vector.broadcast %cst_12 : f32 to vector<8x1xf32>
    %17 = arith.maximumf %15, %16 : vector<8x1xf32>
    %18 = math.rsqrt %17 : vector<8x1xf32>
    %19 = vector.broadcast %18 : vector<8x1xf32> to vector<8x128xf32>
    %20 = arith.mulf %12, %19 : vector<8x128xf32>
    %c0_13 = arith.constant 0 : index
    %c0_14 = arith.constant 0 : index
    %21 = vector.load %arg6[%c0_13, %c0_14] : memref<8x128xf32, #tpu.memory_space<vmem>>, vector<8x128xf32>
    tpu.vector_store %arg6[%c0_13, %c0_14], %20 {strides = array<i32>} : memref<8x128xf32, #tpu.memory_space<vmem>>, vector<8x128xf32>,
    return
  }
  func.func @transform_0(%arg0: i32) -> (i32, i32) {
    %c0_i32 = arith.constant 0 : i32
    %c0_i32_0 = arith.constant 0 : i32
    return %arg0, %c0_i32 : i32, i32
  }
  func.func @transform_1(%arg0: i32) -> (i32, i32) {
    %c0_i32 = arith.constant 0 : i32
    %c0_i32_0 = arith.constant 0 : i32
    %c0_i32_1 = arith.constant 0 : i32
    return %c0_i32, %c0_i32_0 : i32, i32
  }
  func.func @transform_2(%arg0: i32) -> (i32, i32) {
    %c0_i32 = arith.constant 0 : i32
    %c0_i32_0 = arith.constant 0 : i32
    %c0_i32_1 = arith.constant 0 : i32
    return %c0_i32, %c0_i32_0 : i32, i32
  }
  func.func @transform_3(%arg0: i32) -> (i32, i32) {
    %c0_i32 = arith.constant 0 : i32
    %c0_i32_0 = arith.constant 0 : i32
    %c0_i32_1 = arith.constant 0 : i32
    return %c0_i32, %c0_i32_0 : i32, i32
  }
  func.func @transform_4(%arg0: i32) -> (i32, i32) {
    %c0_i32 = arith.constant 0 : i32
    %c0_i32_0 = arith.constant 0 : i32
    %c0_i32_1 = arith.constant 0 : i32
    return %c0_i32, %c0_i32_0 : i32, i32
  }
  func.func @transform_5(%arg0: i32) -> (i32, i32) {
    %c0_i32 = arith.constant 0 : i32
    %c0_i32_0 = arith.constant 0 : i32
    return %arg0, %c0_i32 : i32, i32
  }
}

</mosaic_0001>

<llo_original>
// kernel: _contrastive_cluster_forward.1
$region0: #{_contrastive_cluster_forward.1}
  #allocation0 [shape = 'u32[]', space=smem, size = 0x4, offset = 0x4, fixed_abs, tag = 'smem constant byte address 0x4 - core index']
  #allocation1 [shape = 'u32[144,128]{1,0:T(1,128)}', space=vmem, size = 0x12000, scoped, tag = 'internal scratch']
  %s0 = inlined_call_operand.vmem [shape: f32[8,128], index: 0, kind: input, shape index: {}]
  %s1 = inlined_call_operand.vmem [shape: f32[128,128], index: 1, kind: input, shape index: {}]
  %s2 = inlined_call_operand.vmem [shape: f32[1,128], index: 2, kind: input, shape index: {}]
  %s3 = inlined_call_operand.vmem [shape: f32[128,128], index: 3, kind: input, shape index: {}]
  %s4 = inlined_call_operand.vmem [shape: f32[1,128], index: 4, kind: input, shape index: {}]
  %s5 = inlined_call_operand.hbm [shape: f32[8,128], index: 5, kind: output, shape index: {}]
  %s6 = sld [smem:[#allocation0]]
  $region30: #{_contrastive_cluster_forward.1} parent=0
    _
  %s8 = ssub.s32 1, %s6
  %s9 = scalar_select 0, %s8, %s6
  $region1: #{_contrastive_cluster_forward.1} parent=0
    #allocation2 [shape = 'u8[4096]{0}', space=vmem, size = 0x1000, scoped, tag = 'output window, operand 0, single buffered']
    #allocation3 [shape = 's32[1]{0}', space=sflag, size = 0x4, scoped, tag = 'scoped memory for _contrastive_cluster_forward.1']
    %10 = vsyncpa [#allocation3], 0
    // Predicated region
    $region2: #{_contrastive_cluster_forward.1} parent=1 // pred_check
      _
    $region3: #{_contrastive_cluster_forward.1} parent=1 // pred_check_branch
      %12 = sbr.rel (0) target = $region5
    $region4: #{_contrastive_cluster_forward.1} parent=1 // pred_region
      _
    $region5: #{_contrastive_cluster_forward.1} parent=1 // pred_fallthru
      _
    // Predicated region
    $region6: #{_contrastive_cluster_forward.1} parent=1 // pred_check
      _
    $region7: #{_contrastive_cluster_forward.1} parent=1 // pred_check_branch
      %14 = sbr.rel (0) target = $region9
    $region8: #{_contrastive_cluster_forward.1} parent=1 // pred_region
      _
    $region9: #{_contrastive_cluster_forward.1} parent=1 // pred_fallthru
      _
    // Predicated region
    $region10: #{_contrastive_cluster_forward.1} parent=1 // pred_check
      _
    $region11: #{_contrastive_cluster_forward.1} parent=1 // pred_check_branch
      %16 = sbr.rel (0) target = $region13
    $region12: #{_contrastive_cluster_forward.1} parent=1 // pred_region
      _
    $region13: #{_contrastive_cluster_forward.1} parent=1 // pred_fallthru
      _
    // Predicated region
    $region14: #{_contrastive_cluster_forward.1} parent=1 // pred_check
      _
    $region15: #{_contrastive_cluster_forward.1} parent=1 // pred_check_branch
      %18 = sbr.rel (0) target = $region17
    $region16: #{_contrastive_cluster_forward.1} parent=1 // pred_region
      _
    $region17: #{_contrastive_cluster_forward.1} parent=1 // pred_fallthru
      _
    // Predicated region
    $region18: #{_contrastive_cluster_forward.1} parent=1 // pred_check
      _
    $region19: #{_contrastive_cluster_forward.1} parent=1 // pred_check_branch
      %20 = sbr.rel (0) target = $region21
    $region20: #{_contrastive_cluster_forward.1} parent=1 // pred_region
      _
    $region21: #{_contrastive_cluster_forward.1} parent=1 // pred_fallthru
      _
    %v21 = vld [vmem:[%s0] sm:$0xff]
    %v22 = vld [vmem:[%s1] sm:$0xff]
    %v23 = vld [vmem:[%s1 + $0x8] sm:$0xff]
    %v24 = vld [vmem:[%s1 + $0x10] sm:$0xff]
    %v25 = vld [vmem:[%s1 + $0x18] sm:$0xff]
    %v26 = vld [vmem:[%s1 + $0x20] sm:$0xff]
    %v27 = vld [vmem:[%s1 + $0x28] sm:$0xff]
    %v28 = vld [vmem:[%s1 + $0x30] sm:$0xff]
    %v29 = vld [vmem:[%s1 + $0x38] sm:$0xff]
    %v30 = vld [vmem:[%s1 + $0x40] sm:$0xff]
    %v31 = vld [vmem:[%s1 + $0x48] sm:$0xff]
    %v32 = vld [vmem:[%s1 + $0x50] sm:$0xff]
    %v33 = vld [vmem:[%s1 + $0x58] sm:$0xff]
    %v34 = vld [vmem:[%s1 + $0x60] sm:$0xff]
    %v35 = vld [vmem:[%s1 + $0x68] sm:$0xff]
    %v36 = vld [vmem:[%s1 + $0x70] sm:$0xff]
    %v37 = vld [vmem:[%s1 + $0x78] sm:$0xff]
    %v38 = vld [vmem:[%s2] sm:$0x1]
    %v40 = vlaneseq
    %v41 = vshrl.u32 %v40, 7
    %v42 = vsub.s32 0, %v41
    %v43 = vrot.slane %v38, %v42
    %45 = vmatprep.subr.mxu0 0.0
    %46 = vmatpush1.msra.mxu0 %v22
    %47 = vmatprep.subr.mxu0 0.0
    %48 = vmatpush1.msra.mxu0 %v23
    %49 = vmatprep.subr.mxu0 0.0
    %50 = vmatpush1.msra.mxu0 %v24
    %51 = vmatprep.subr.mxu0 0.0
    %52 = vmatpush1.msra.mxu0 %v25
    %53 = vmatprep.subr.mxu0 0.0
    %54 = vmatpush1.msra.mxu0 %v26
    %55 = vmatprep.subr.mxu0 0.0
    %56 = vmatpush1.msra.mxu0 %v27
    %57 = vmatprep.subr.mxu0 0.0
    %58 = vmatpush1.msra.mxu0 %v28
    %59 = vmatprep.subr.mxu0 0.0
    %60 = vmatpush1.msra.mxu0 %v29
    %61 = vmatprep.subr.mxu0 0.0
    %62 = vmatpush1.msra.mxu0 %v30
    %63 = vmatprep.subr.mxu0 0.0
    %64 = vmatpush1.msra.mxu0 %v31
    %65 = vmatprep.subr.mxu0 0.0
    %66 = vmatpush1.msra.mxu0 %v32
    %67 = vmatprep.subr.mxu0 0.0
    %68 = vmatpush1.msra.mxu0 %v33
    %69 = vmatprep.subr.mxu0 0.0
    %70 = vmatpush1.msra.mxu0 %v34
    %71 = vmatprep.subr.mxu0 0.0
    %72 = vmatpush1.msra.mxu0 %v35
    %73 = vmatprep.subr.mxu0 0.0
    %74 = vmatpush1.msra.mxu0 %v36
    %75 = vmatprep.subr.mxu0 0.0
    %76 = vmatpush1.msra.mxu0 %v37
    %77 = vmatprep.subr.mxu0 0.0
    %78 = vmatpush1.msra.mxu0 0.0
    %79 = vmatprep.subr.mxu0 0.0
    %80 = vmatpush1.msra.mxu0 0.0
    %81 = vmatprep.subr.mxu0 0.0
    %82 = vmatpush1.msra.mxu0 0.0
    %83 = vmatprep.subr.mxu0 0.0
    %84 = vmatpush1.msra.mxu0 0.0
    %85 = vmatprep.subr.mxu0 0.0
    %86 = vmatpush1.msra.mxu0 0.0
    %87 = vmatprep.subr.mxu0 0.0
    %88 = vmatpush1.msra.mxu0 0.0
    %89 = vmatprep.subr.mxu0 0.0
    %90 = vmatpush1.msra.mxu0 0.0
    %91 = vmatprep.subr.mxu0 0.0
    %92 = vmatpush1.msra.mxu0 0.0
    %93 = vmatprep.subr.mxu0 0.0
    %94 = vmatpush1.msra.mxu0 0.0
    %95 = vmatprep.subr.mxu0 0.0
    %96 = vmatpush1.msra.mxu0 0.0
    %97 = vmatprep.subr.mxu0 0.0
    %98 = vmatpush1.msra.mxu0 0.0
    %99 = vmatprep.subr.mxu0 0.0
    %100 = vmatpush1.msra.mxu0 0.0
    %101 = vmatprep.subr.mxu0 0.0
    %102 = vmatpush1.msra.mxu0 0.0
    %103 = vmatprep.subr.mxu0 0.0
    %104 = vmatpush1.msra.mxu0 0.0
    %105 = vmatprep.subr.mxu0 0.0
    %106 = vmatpush1.msra.mxu0 0.0
    %107 = vmatprep.subr.mxu0 0.0
    %108 = vmatpush1.msra.mxu0 0.0
    %109 = vmatprep.mubr.f32.mxu0 0.0
    %110 = vmatmul.mubr.f32.gmra.mrb[0].mxu0 %v21
    %v111 = vpop.f32.mrb[0].mxu0
    %v112 = vadd.f32 %v43, %v111
    %v113 = vpop.f32.mrb[0].mxu0
    %114 = vdwg.mxu0
    %v115 = vmax.f32 %v112, 0.0
    %v116 = vld [vmem:[%s3] sm:$0xff]
    %v117 = vld [vmem:[%s3 + $0x8] sm:$0xff]
    %v118 = vld [vmem:[%s3 + $0x10] sm:$0xff]
    %v119 = vld [vmem:[%s3 + $0x18] sm:$0xff]
    %v120 = vld [vmem:[%s3 + $0x20] sm:$0xff]
    %v121 = vld [vmem:[%s3 + $0x28] sm:$0xff]
    %v122 = vld [vmem:[%s3 + $0x30] sm:$0xff]
    %v123 = vld [vmem:[%s3 + $0x38] sm:$0xff]
    %v124 = vld [vmem:[%s3 + $0x40] sm:$0xff]
    %v125 = vld [vmem:[%s3 + $0x48] sm:$0xff]
    %v126 = vld [vmem:[%s3 + $0x50] sm:$0xff]
    %v127 = vld [vmem:[%s3 + $0x58] sm:$0xff]
    %v128 = vld [vmem:[%s3 + $0x60] sm:$0xff]
    %v129 = vld [vmem:[%s3 + $0x68] sm:$0xff]
    %v130 = vld [vmem:[%s3 + $0x70] sm:$0xff]
    %v131 = vld [vmem:[%s3 + $0x78] sm:$0xff]
    %v132 = vld [vmem:[%s4] sm:$0x1]
    %v134 = vlaneseq
    %v135 = vshrl.u32 %v134, 7
    %v136 = vsub.s32 0, %v135
    %v137 = vrot.slane %v132, %v136
    %139 = vmatprep.subr.mxu0 0.0
    %140 = vmatpush1.msra.mxu0 %v116
    %141 = vmatprep.subr.mxu0 0.0
    %142 = vmatpush1.msra.mxu0 %v117
    %143 = vmatprep.subr.mxu0 0.0
    %144 = vmatpush1.msra.mxu0 %v118
    %145 = vmatprep.subr.mxu0 0.0
    %146 = vmatpush1.msra.mxu0 %v119
    %147 = vmatprep.subr.mxu0 0.0
    %148 = vmatpush1.msra.mxu0 %v120
    %149 = vmatprep.subr.mxu0 0.0
    %150 = vmatpush1.msra.mxu0 %v121
    %151 = vmatprep.subr.mxu0 0.0
    %152 = vmatpush1.msra.mxu0 %v122
    %153 = vmatprep.subr.mxu0 0.0
    %154 = vmatpush1.msra.mxu0 %v123
    %155 = vmatprep.subr.mxu0 0.0
    %156 = vmatpush1.msra.mxu0 %v124
    %157 = vmatprep.subr.mxu0 0.0
    %158 = vmatpush1.msra.mxu0 %v125
    %159 = vmatprep.subr.mxu0 0.0
    %160 = vmatpush1.msra.mxu0 %v126
    %161 = vmatprep.subr.mxu0 0.0
    %162 = vmatpush1.msra.mxu0 %v127
    %163 = vmatprep.subr.mxu0 0.0
    %164 = vmatpush1.msra.mxu0 %v128
    %165 = vmatprep.subr.mxu0 0.0
    %166 = vmatpush1.msra.mxu0 %v129
    %167 = vmatprep.subr.mxu0 0.0
    %168 = vmatpush1.msra.mxu0 %v130
    %169 = vmatprep.subr.mxu0 0.0
    %170 = vmatpush1.msra.mxu0 %v131
    %171 = vmatprep.subr.mxu0 0.0
    %172 = vmatpush1.msra.mxu0 0.0
    %173 = vmatprep.subr.mxu0 0.0
    %174 = vmatpush1.msra.mxu0 0.0
    %175 = vmatprep.subr.mxu0 0.0
    %176 = vmatpush1.msra.mxu0 0.0
    %177 = vmatprep.subr.mxu0 0.0
    %178 = vmatpush1.msra.mxu0 0.0
    %179 = vmatprep.subr.mxu0 0.0
    %180 = vmatpush1.msra.mxu0 0.0
    %181 = vmatprep.subr.mxu0 0.0
    %182 = vmatpush1.msra.mxu0 0.0
    %183 = vmatprep.subr.mxu0 0.0
    %184 = vmatpush1.msra.mxu0 0.0
    %185 = vmatprep.subr.mxu0 0.0
    %186 = vmatpush1.msra.mxu0 0.0
    %187 = vmatprep.subr.mxu0 0.0
    %188 = vmatpush1.msra.mxu0 0.0
    %189 = vmatprep.subr.mxu0 0.0
    %190 = vmatpush1.msra.mxu0 0.0
    %191 = vmatprep.subr.mxu0 0.0
    %192 = vmatpush1.msra.mxu0 0.0
    %193 = vmatprep.subr.mxu0 0.0
    %194 = vmatpush1.msra.mxu0 0.0
    %195 = vmatprep.subr.mxu0 0.0
    %196 = vmatpush1.msra.mxu0 0.0
    %197 = vmatprep.subr.mxu0 0.0
    %198 = vmatpush1.msra.mxu0 0.0
    %199 = vmatprep.subr.mxu0 0.0
    %200 = vmatpush1.msra.mxu0 0.0
    %201 = vmatprep.subr.mxu0 0.0
    %202 = vmatpush1.msra.mxu0 0.0
    %203 = vmatprep.mubr.f32.mxu0 0.0
    %204 = vmatmul.mubr.f32.gmra.mrb[0].mxu0 %v115
    %v205 = vpop.f32.mrb[0].mxu0
    %v206 = vadd.f32 %v137, %v205
    %v207 = vpop.f32.mrb[0].mxu0
    %208 = vdwg.mxu0
    %v209 = vmul.f32 %v206, %v206
    %210 = vadd.xlane.f32.xlu0 %v209
    %v211 = vpop.xlane.xlu0 %210
    %v212 = vmax.f32 %v211, 1e-24
    %v213 = vrsqrt.pop %v212
    %v214 = vmul.f32 %v206, %v213
    %215 = vst [vmem:[#allocation2] sm:$0xff] %v214
    // Predicated region
    $region22: #{_contrastive_cluster_forward.1} parent=1 // pred_check
      _
    $region23: #{_contrastive_cluster_forward.1} parent=1 // pred_check_branch
      %217 = sbr.rel (0) target = $region25
    $region24: #{_contrastive_cluster_forward.1} parent=1 // pred_region
      %s219 = ssub.s32 128, 128
      %220 = vsyncadd [#allocation3], %s219
      %s222 = sshll.u32 [#allocation2], 4
      %s223 = int_to_ptr.vmem [resolvable:$true] %s222
      %225 = dma.vmem_to_hbm [thread:$0]  %s223, 128, %s5, [#allocation3]
    $region25: #{_contrastive_cluster_forward.1} parent=1 // pred_fallthru
      _
    // Predicated region
    $region26: #{_contrastive_cluster_forward.1} parent=1 // pred_check
      _
    $region27: #{_contrastive_cluster_forward.1} parent=1 // pred_check_branch
      %227 = sbr.rel (0) target = $region29
    $region28: #{_contrastive_cluster_forward.1} parent=1 // pred_region
      %228 = dma.done [#allocation3], 128
    $region29: #{_contrastive_cluster_forward.1} parent=1 // pred_fallthru
      _
    %229 = vsyncpa [#allocation3], 1

</llo_original>
